<compile_context>
chip_gen: v5e
topology: v5e:2x2
jax: 0.10.0
libtpu: 0.0.40
codegen_flags: <defaults>
</compile_context>

<pallas_src>
import jax
import jax.numpy as jnp
from jax.experimental import pallas as pl
from jax.experimental.pallas import tpu as pltpu  # noqa: F401  (TPU backend)


# ---------------------------------------------------------------------------
# Kernel 1: batched input-side projection for all timesteps at once.
#   x2d: (S*B, In) -> gates_x: (S*B, 4H)   (gate order i, f, g, o like PyTorch)
# ---------------------------------------------------------------------------
def _input_projection_kernel(x_ref, wemb_ref, bemb_ref, wih_ref, b_ref, gx_ref):
    emb = jnp.dot(x_ref[...], wemb_ref[...],
                  preferred_element_type=jnp.float32) + bemb_ref[...]
    gx_ref[...] = jnp.dot(emb, wih_ref[...],
                          preferred_element_type=jnp.float32) + b_ref[...]


# ---------------------------------------------------------------------------
# Kernel 2: LSTM recurrence.  One invocation, in-kernel time loop.
#   gx*:  (S, B, H) per-gate precomputed input projections (resident in VMEM)
#   whh*: (H, H)    per-gate recurrent weights (resident in VMEM)
#   out:  (S, B, H) all hidden states; hn/cn: (1, B, H) final states.
# ---------------------------------------------------------------------------
def _lstm_recurrence_kernel(gxi_ref, gxf_ref, gxg_ref, gxo_ref,
                            whhi_ref, whhf_ref, whhg_ref, whho_ref,
                            out_ref, hn_ref, cn_ref):
    S, B, H = out_ref.shape

    # Load recurrent weights once; reused every step.
    whh_i = whhi_ref[...]
    whh_f = whhf_ref[...]
    whh_g = whhg_ref[...]
    whh_o = whho_ref[...]

    def step(t, carry):
        h, c = carry
        pre_i = gxi_ref[t] + jnp.dot(h, whh_i, preferred_element_type=jnp.float32)
        pre_f = gxf_ref[t] + jnp.dot(h, whh_f, preferred_element_type=jnp.float32)
        pre_g = gxg_ref[t] + jnp.dot(h, whh_g, preferred_element_type=jnp.float32)
        pre_o = gxo_ref[t] + jnp.dot(h, whh_o, preferred_element_type=jnp.float32)
        i_g = jax.nn.sigmoid(pre_i)
        f_g = jax.nn.sigmoid(pre_f)
        g_g = jnp.tanh(pre_g)
        o_g = jax.nn.sigmoid(pre_o)
        c_new = f_g * c + i_g * g_g
        h_new = o_g * jnp.tanh(c_new)
        out_ref[t] = h_new            # VMEM store; HBM writeback happens once.
        return h_new, c_new

    h0 = jnp.zeros((B, H), jnp.float32)
    c0 = jnp.zeros((B, H), jnp.float32)

    if S <= 32:
        # Short, fixed trip count: fully unroll for scheduler visibility.
        h_fin, c_fin = h0, c0
        for t in range(S):
            h_fin, c_fin = step(t, (h_fin, c_fin))
    else:
        h_fin, c_fin = jax.lax.fori_loop(0, S, step, (h0, c0))

    # Final states written exactly once, after the recurrence.
    hn_ref[0] = h_fin
    cn_ref[0] = c_fin


def lstm_encoder_forward(x, params):
    """x: (seq_len, batch, input_size) float32.  Matches nn.Linear + nn.LSTM."""
    S, B, In = x.shape
    w_emb = params["w_emb"]      # (input_size, emb_dim)  == nn.Linear weight.T
    b_emb = params["b_emb"]      # (1, emb_dim)
    w_ih = params["w_ih"]        # (emb_dim, 4*hidden)    == weight_ih_l0.T
    w_hh = params["w_hh"]        # (hidden, 4*hidden)     == weight_hh_l0.T
    b = params["b"]              # (1, 4*hidden)          == bias_ih_l0 + bias_hh_l0
    E = w_emb.shape[1]
    H = w_hh.shape[0]

    # ---- 1) input projection for all timesteps in one batched matmul ----
    x2d = x.reshape(S * B, In)
    gates_x = pl.pallas_call(
        _input_projection_kernel,
        out_shape=jax.ShapeDtypeStruct((S * B, 4 * H), jnp.float32),
    )(x2d, w_emb, b_emb, w_ih, b)

    # One-time reorganization (outside the serial path): split per gate
    # (PyTorch order i, f, g, o) and go back to time-major (S, B, H).
    gx = gates_x.reshape(S, B, 4 * H)
    gx_i = gx[..., 0 * H:1 * H]
    gx_f = gx[..., 1 * H:2 * H]
    gx_g = gx[..., 2 * H:3 * H]
    gx_o = gx[..., 3 * H:4 * H]

    # Per-gate recurrent weight blocks, each (H, H).
    whh_i = w_hh[:, 0 * H:1 * H]
    whh_f = w_hh[:, 1 * H:2 * H]
    whh_g = w_hh[:, 2 * H:3 * H]
    whh_o = w_hh[:, 3 * H:4 * H]

    # ---- 2) recurrence: one kernel invocation, time loop inside ----
    lstm_out, h_n, c_n = pl.pallas_call(
        _lstm_recurrence_kernel,
        out_shape=(
            jax.ShapeDtypeStruct((S, B, H), jnp.float32),
            jax.ShapeDtypeStruct((1, B, H), jnp.float32),
            jax.ShapeDtypeStruct((1, B, H), jnp.float32),
        ),
    )(gx_i, gx_f, gx_g, gx_o, whh_i, whh_f, whh_g, whh_o)

    return lstm_out, (h_n, c_n)


def _reference_forward(x, params):
    """Pure-JAX reference (PyTorch LSTM semantics) for verification."""
    S, B, In = x.shape
    H = params["w_hh"].shape[0]
    emb = x @ params["w_emb"] + params["b_emb"]          # (S, B, E)

    def step(carry, e_t):
        h, c = carry
        gates = e_t @ params["w_ih"] + h @ params["w_hh"] + params["b"]
        i = jax.nn.sigmoid(gates[:, 0 * H:1 * H])
        f = jax.nn.sigmoid(gates[:, 1 * H:2 * H])
        g = jnp.tanh(gates[:, 2 * H:3 * H])
        o = jax.nn.sigmoid(gates[:, 3 * H:4 * H])
        c = f * c + i * g
        h = o * jnp.tanh(c)
        return (h, c), h

    h0 = jnp.zeros((B, H), jnp.float32)
    c0 = jnp.zeros((B, H), jnp.float32)
    (h_n, c_n), outs = jax.lax.scan(step, (h0, c0), emb)
    return outs, (h_n[None], c_n[None])


if __name__ == "__main__":
    # Small, deterministic problem consistent with the module's forward:
    seq_len, batch, input_size = 8, 2, 4
    emb_dim, hidden_size = 16, 32

    key = jax.random.PRNGKey(0)
    kx, k1, k2, k3, k4, k5, k6 = jax.random.split(key, 7)

    x = jax.random.normal(kx, (seq_len, batch, input_size), jnp.float32)

    scale = 0.1
    params = {
        # nn.Linear(input_size, emb_dim): weight (emb_dim, input_size) -> stored transposed
        "w_emb": scale * jax.random.normal(k1, (input_size, emb_dim), jnp.float32),
        "b_emb": scale * jax.random.normal(k2, (1, emb_dim), jnp.float32),
        # nn.LSTM(emb_dim, hidden_size): weight_ih_l0 (4H, E) -> transposed, etc.
        "w_ih": scale * jax.random.normal(k3, (emb_dim, 4 * hidden_size), jnp.float32),
        "w_hh": scale * jax.random.normal(k4, (hidden_size, 4 * hidden_size), jnp.float32),
        "b": scale * (jax.random.normal(k5, (1, 4 * hidden_size), jnp.float32)
                      + jax.random.normal(k6, (1, 4 * hidden_size), jnp.float32)),
    }

    lstm_out, (h_n, c_n) = lstm_encoder_forward(x, params)
    jax.block_until_ready((lstm_out, h_n, c_n))

    ref_out, (ref_h, ref_c) = _reference_forward(x, params)
    assert lstm_out.shape == (seq_len, batch, hidden_size)
    assert h_n.shape == (1, batch, hidden_size) and c_n.shape == (1, batch, hidden_size)
    assert jnp.allclose(lstm_out, ref_out, atol=1e-5)
    assert jnp.allclose(h_n, ref_h, atol=1e-5)
    assert jnp.allclose(c_n, ref_c, atol=1e-5)

    print("KERNEL_OK")
</pallas_src>

<mosaic_0001>
module attributes {stable_mosaic.version = 11 : i64} {
  func.func @_input_projection_kernel(%arg0: memref<16x4xf32, #tpu.memory_space<vmem>>, %arg1: memref<4x16xf32, #tpu.memory_space<vmem>>, %arg2: memref<1x16xf32, #tpu.memory_space<vmem>>, %arg3: memref<16x128xf32, #tpu.memory_space<vmem>>, %arg4: memref<1x128xf32, #tpu.memory_space<vmem>>, %arg5: memref<16x128xf32, #tpu.memory_space<vmem>>) attributes {dimension_semantics = [], scalar_prefetch = 0 : i64, scratch_operands = 0 : i64, tpu.core_type = #tpu.core_type<tc>} {
    %c0 = arith.constant 0 : index
    %c0_0 = arith.constant 0 : index
    %0 = vector.load %arg0[%c0, %c0_0] : memref<16x4xf32, #tpu.memory_space<vmem>>, vector<16x4xf32>
    %c0_1 = arith.constant 0 : index
    %c0_2 = arith.constant 0 : index
    %1 = vector.load %arg1[%c0_1, %c0_2] : memref<4x16xf32, #tpu.memory_space<vmem>>, vector<4x16xf32>
    %cst = arith.constant dense<0.000000e+00> : vector<16x16xf32>
    %2 = tpu.matmul %0, %1, %cst {dimension_numbers = #tpu.dot_dimension_numbers<[1], [0], [0], [1], [0, 0, 1, 1], [], []>} : vector<16x4xf32>, vector<4x16xf32>, vector<16x16xf32> -> vector<16x16xf32>
    %c0_3 = arith.constant 0 : index
    %c0_4 = arith.constant 0 : index
    %3 = vector.load %arg2[%c0_3, %c0_4] : memref<1x16xf32, #tpu.memory_space<vmem>>, vector<1x16xf32>
    %4 = vector.broadcast %3 : vector<1x16xf32> to vector<16x16xf32>
    %5 = arith.addf %2, %4 : vector<16x16xf32>
    %c0_5 = arith.constant 0 : index
    %c0_6 = arith.constant 0 : index
    %6 = vector.load %arg3[%c0_5, %c0_6] : memref<16x128xf32, #tpu.memory_space<vmem>>, vector<16x128xf32>
    %cst_7 = arith.constant dense<0.000000e+00> : vector<16x128xf32>
    %7 = tpu.matmul %5, %6, %cst_7 {dimension_numbers = #tpu.dot_dimension_numbers<[1], [0], [0], [1], [0, 0, 1, 1], [], []>} : vector<16x16xf32>, vector<16x128xf32>, vector<16x128xf32> -> vector<16x128xf32>
    %c0_8 = arith.constant 0 : index
    %c0_9 = arith.constant 0 : index
    %8 = vector.load %arg4[%c0_8, %c0_9] : memref<1x128xf32, #tpu.memory_space<vmem>>, vector<1x128xf32>
    %9 = vector.broadcast %8 : vector<1x128xf32> to vector<16x128xf32>
    %10 = arith.addf %7, %9 : vector<16x128xf32>
    %c0_10 = arith.constant 0 : index
    %c0_11 = arith.constant 0 : index
    %11 = vector.load %arg5[%c0_10, %c0_11] : memref<16x128xf32, #tpu.memory_space<vmem>>, vector<16x128xf32>
    tpu.vector_store %arg5[%c0_10, %c0_11], %10 {strides = array<i32>} : memref<16x128xf32, #tpu.memory_space<vmem>>, vector<16x128xf32>,
    return
  }
}

</mosaic_0001>

<llo_original>
// kernel: tpu_custom_call.1
$region0: #{tpu_custom_call.1}
  #allocation0 [shape = 'u32[]', space=smem, size = 0x4, offset = 0x4, fixed_abs, tag = 'smem constant byte address 0x4 - core index']
  #allocation1 [shape = 'u32[72,128]{1,0:T(1,128)}', space=vmem, size = 0x9000, scoped, tag = 'internal scratch']
  %s0 = inlined_call_operand.vmem [shape: f32[16,4], index: 0, kind: input, shape index: {}]
  %s1 = inlined_call_operand.vmem [shape: f32[4,16], index: 1, kind: input, shape index: {}]
  %s2 = inlined_call_operand.vmem [shape: f32[1,16], index: 2, kind: input, shape index: {}]
  %s3 = inlined_call_operand.vmem [shape: f32[16,128], index: 3, kind: input, shape index: {}]
  %s4 = inlined_call_operand.vmem [shape: f32[1,128], index: 4, kind: input, shape index: {}]
  %s5 = inlined_call_operand.hbm [shape: f32[16,128], index: 5, kind: output, shape index: {}]
  %s6 = sld [smem:[#allocation0]]
  $region30: #{tpu_custom_call.1} parent=0
    _
  %s8 = ssub.s32 1, %s6
  %s9 = scalar_select 0, %s8, %s6
  $region1: #{tpu_custom_call.1} parent=0
    #allocation2 [shape = 'u8[8192]{0}', space=vmem, size = 0x2000, scoped, tag = 'output window, operand 0, single buffered']
    #allocation3 [shape = 's32[1]{0}', space=sflag, size = 0x4, scoped, tag = 'scoped memory for tpu_custom_call.1']
    %10 = vsyncpa [#allocation3], 0
    // Predicated region
    $region2: #{tpu_custom_call.1} parent=1 // pred_check
      _
    $region3: #{tpu_custom_call.1} parent=1 // pred_check_branch
      %12 = sbr.rel (0) target = $region5
    $region4: #{tpu_custom_call.1} parent=1 // pred_region
      _
    $region5: #{tpu_custom_call.1} parent=1 // pred_fallthru
      _
    // Predicated region
    $region6: #{tpu_custom_call.1} parent=1 // pred_check
      _
    $region7: #{tpu_custom_call.1} parent=1 // pred_check_branch
      %14 = sbr.rel (0) target = $region9
    $region8: #{tpu_custom_call.1} parent=1 // pred_region
      _
    $region9: #{tpu_custom_call.1} parent=1 // pred_fallthru
      _
    // Predicated region
    $region10: #{tpu_custom_call.1} parent=1 // pred_check
      _
    $region11: #{tpu_custom_call.1} parent=1 // pred_check_branch
      %16 = sbr.rel (0) target = $region13
    $region12: #{tpu_custom_call.1} parent=1 // pred_region
      _
    $region13: #{tpu_custom_call.1} parent=1 // pred_fallthru
      _
    // Predicated region
    $region14: #{tpu_custom_call.1} parent=1 // pred_check
      _
    $region15: #{tpu_custom_call.1} parent=1 // pred_check_branch
      %18 = sbr.rel (0) target = $region17
    $region16: #{tpu_custom_call.1} parent=1 // pred_region
      _
    $region17: #{tpu_custom_call.1} parent=1 // pred_fallthru
      _
    // Predicated region
    $region18: #{tpu_custom_call.1} parent=1 // pred_check
      _
    $region19: #{tpu_custom_call.1} parent=1 // pred_check_branch
      %20 = sbr.rel (0) target = $region21
    $region20: #{tpu_custom_call.1} parent=1 // pred_region
      _
    $region21: #{tpu_custom_call.1} parent=1 // pred_fallthru
      _
    %v21 = vld [vmem:[%s0] sm:$0xff]
    %v22 = vld [vmem:[%s0 + $0x8] sm:$0xff]
    %v23 = vld [vmem:[%s1] sm:$0xf]
    %v24 = vld [vmem:[%s2] sm:$0x1]
    %v26 = vperm.slane %v24, 0
    %vm28 = vcmask 31744
    %v30 = vsel %vm28, %v21, 0
    %v33 = vsel %vm28, %v22, 0
    %vm35 = vcmask 1043456
    %v37 = vsel %vm35, %v23, 0
    %39 = vmatpush.msra.mxu0 0.0
    %40 = vmatpush.msra.mxu0 0.0
    %41 = vmatpush.msra.mxu0 0.0
    %42 = vmatpush.msra.mxu0 0.0
    %43 = vmatpush.msra.mxu0 0.0
    %44 = vmatpush.msra.mxu0 0.0
    %45 = vmatpush.msra.mxu0 0.0
    %46 = vmatpush.msra.mxu0 0.0
    %47 = vmatpush.msra.mxu0 0.0
    %48 = vmatpush.msra.mxu0 0.0
    %49 = vmatpush.msra.mxu0 0.0
    %50 = vmatpush.msra.mxu0 0.0
    %51 = vmatpush.msra.mxu0 0.0
    %52 = vmatpush.msra.mxu0 0.0
    %53 = vmatpush.msra.mxu0 0.0
    %54 = vmatpush.msra.mxu0 %v37
    %55 = vmatmul.f32.gmra.mxu0 %v30
    %v56 = vpop.f32.mrf.mxu0
    %v57 = vadd.f32 %v26, %v56
    %58 = vmatmul.f32.gmra.mxu0 %v33
    %v59 = vpop.f32.mrf.mxu0
    %v60 = vadd.f32 %v26, %v59
    %61 = vdwg.mxu0
    %v62 = vld [vmem:[%s3] sm:$0xff]
    %v63 = vld [vmem:[%s3 + $0x8] sm:$0xff]
    %v64 = vld [vmem:[%s4] sm:$0x1]
    %v66 = vperm.slane %v64, 0
    %vm68 = vcmask 130048
    %v70 = vsel %vm68, %v57, 0
    %v73 = vsel %vm68, %v60, 0
    %75 = vmatpush.msra.mxu0 0.0
    %76 = vmatpush.msra.mxu0 0.0
    %77 = vmatpush.msra.mxu0 0.0
    %78 = vmatpush.msra.mxu0 0.0
    %79 = vmatpush.msra.mxu0 0.0
    %80 = vmatpush.msra.mxu0 0.0
    %81 = vmatpush.msra.mxu0 0.0
    %82 = vmatpush.msra.mxu0 0.0
    %83 = vmatpush.msra.mxu0 0.0
    %84 = vmatpush.msra.mxu0 0.0
    %85 = vmatpush.msra.mxu0 0.0
    %86 = vmatpush.msra.mxu0 0.0
    %87 = vmatpush.msra.mxu0 0.0
    %88 = vmatpush.msra.mxu0 0.0
    %89 = vmatpush.msra.mxu0 %v63
    %90 = vmatpush.msra.mxu0 %v62
    %91 = vmatmul.f32.gmra.mxu0 %v70
    %v92 = vpop.f32.mrf.mxu0
    %v93 = vadd.f32 %v66, %v92
    %94 = vmatmul.f32.gmra.mxu0 %v73
    %v95 = vpop.f32.mrf.mxu0
    %v96 = vadd.f32 %v66, %v95
    %97 = vdwg.mxu0
    %98 = vst [vmem:[#allocation2] sm:$0xff] %v93
    %99 = vst [vmem:[#allocation2 + $0x8] sm:$0xff] %v96
    // Predicated region
    $region22: #{tpu_custom_call.1} parent=1 // pred_check
      _
    $region23: #{tpu_custom_call.1} parent=1 // pred_check_branch
      %101 = sbr.rel (0) target = $region25
    $region24: #{tpu_custom_call.1} parent=1 // pred_region
      %103 = vsyncadd [#allocation3], 0
      %s104 = sshll.u32 [#allocation2], 4
      %s105 = int_to_ptr.vmem [resolvable:$true] %s104
      %s106 = sshll.u32 %s5, 4
      %s107 = int_to_ptr.hbm [resolvable:$true] %s106
      %112 = dma.vmem_to_hbm [thread:$0]  %s105, 256, %s107, [#allocation3], 128, 128, 8
    $region25: #{tpu_custom_call.1} parent=1 // pred_fallthru
      _
    // Predicated region
    $region26: #{tpu_custom_call.1} parent=1 // pred_check
      _
    $region27: #{tpu_custom_call.1} parent=1 // pred_check_branch
      %114 = sbr.rel (0) target = $region29
    $region28: #{tpu_custom_call.1} parent=1 // pred_region
      %116 = dma.done [#allocation3], 256
    $region29: #{tpu_custom_call.1} parent=1 // pred_fallthru
      _
    %117 = vsyncpa [#allocation3], 1

</llo_original>
